<compile_context>
chip_gen: v7x
topology: tpu7x:2x2x1
jax: 0.10.0
libtpu: 0.0.40
codegen_flags: <defaults>
</compile_context>

<pallas_src>
import functools

import jax
import jax.numpy as jnp
from jax import lax
from jax.experimental import pallas as pl
from jax.experimental.pallas import tpu as pltpu

_LANE = 128


def _cdiv(a, b):
    return -(-a // b)


# ----------------------------------------------------------------------------
# Pallas kernels
# ----------------------------------------------------------------------------
def _gp_small_kernel(g_ref, o_ref):
    """Single-block fast path.  g_ref: (B, R, 128) whole tensor.  o_ref: (1, 1)."""
    g = g_ref[...].astype(jnp.float32)               # cast in-kernel (bf16 ok)
    sq = g * g
    per_lane = jnp.sum(sq, axis=1)                   # (B, 128) lane partials
    ssq = jnp.sum(per_lane, axis=1, keepdims=True)   # (B, 1) per-sample sum sq
    norm = jnp.sqrt(ssq)
    o_ref[...] = jnp.mean((norm - 1.0) ** 2, keepdims=True)   # (1, 1)


def _gp_partial_kernel(g_ref, p_ref, acc_ref, *, rows_total, rows_per_block,
                       blocks_per_core, needs_mask):
    """Tiled path.  grid = (num_cores, blocks_per_core).

    g_ref  : (B, RT, 128) tile of sub-rows (native dtype).
    p_ref  : (1, B, 128)  per-core lane-partial sum of squares (f32).
    acc_ref: (B, 128)     f32 VMEM accumulator, persists across the k axis.
    """
    c = pl.program_id(0)
    k = pl.program_id(1)
    nk = pl.num_programs(1)

    @pl.when(k == 0)
    def _():
        acc_ref[...] = jnp.zeros_like(acc_ref)

    g = g_ref[...].astype(jnp.float32)               # (B, RT, 128)
    sq = g * g
    if needs_mask:
        # Zero sub-rows past the real end: covers the ragged last tile and the
        # clamped duplicate tiles created by rounding tiles up to num_cores.
        tile_id = c * blocks_per_core + k
        row = lax.broadcasted_iota(jnp.int32, sq.shape, 1) + tile_id * rows_per_block
        sq = jnp.where(row < rows_total, sq, 0.0)
    acc_ref[...] += jnp.sum(sq, axis=1)              # (B, 128) VALU adds

    @pl.when(k == nk - 1)
    def _():
        p_ref[...] = acc_ref[...][None, :, :]


# ----------------------------------------------------------------------------
# Wrapper: gradient-penalty reduction over flattened gradients
# ----------------------------------------------------------------------------
def gradient_penalty_from_grads(grad_interp, *,
                                target_block_bytes=4 * 1024 * 1024,
                                num_cores=2):
    """loss = mean((||grad_interp.reshape(B, -1)||_2 - 1)^2), reduced in Pallas."""
    B = grad_interp.shape[0]
    g = grad_interp.reshape(B, -1)                   # native dtype: no upcast here
    N = g.shape[1]

    # Lane-align N.  N = C*H*W is a multiple of 128 in practice, so this pad
    # (a full HBM copy) is only a rare fallback; zeros don't change sum of squares.
    if N % _LANE != 0:
        pad = (-N) % _LANE
        g = jnp.pad(g, ((0, 0), (0, pad)))
        N += pad

    R = N // _LANE                                    # sub-rows per sample
    g3 = g.reshape(B, R, _LANE)                       # free reshape (contiguous)
    itemsize = g.dtype.itemsize
    total_block_bytes = B * R * _LANE * itemsize

    # ---------------- small-input fast path: one block, no pipeline ----------
    if total_block_bytes <= target_block_bytes:
        out = pl.pallas_call(
            _gp_small_kernel,
            out_shape=jax.ShapeDtypeStruct((1, 1), jnp.float32),
            grid_spec=pltpu.PrefetchScalarGridSpec(
                num_scalar_prefetch=0,
                grid=(1,),
                in_specs=[pl.BlockSpec((B, R, _LANE), lambda i: (0, 0, 0))],
                out_specs=pl.BlockSpec((1, 1), lambda i: (0, 0)),
            ),
            compiler_params=pltpu.CompilerParams(
                dimension_semantics=("arbitrary",)),
            cost_estimate=pl.CostEstimate(
                flops=2 * B * R * _LANE, transcendentals=B,
                bytes_accessed=B * R * _LANE * itemsize + 4),
        )(g3)
        return out[0, 0]

    # ---------------- tiled / multi-core path --------------------------------
    row_bytes = B * _LANE * itemsize
    rt = max(8, (target_block_bytes // row_bytes) // 8 * 8)   # sub-rows / block
    rt = min(rt, R)                                   # rt % 8 == 0 or rt == R
    nblocks = _cdiv(R, rt)
    nc = max(1, min(num_cores, nblocks))
    k_per_core = _cdiv(nblocks, nc)
    needs_mask = (nc * k_per_core * rt) != R

    def in_index(c, k):
        # Clamp so padding tiles re-read a valid block; their contribution is
        # zeroed by the in-kernel row mask.
        return (0, jnp.minimum(c * k_per_core + k, nblocks - 1), 0)

    kernel = functools.partial(
        _gp_partial_kernel, rows_total=R, rows_per_block=rt,
        blocks_per_core=k_per_core, needs_mask=needs_mask)

    partials = pl.pallas_call(
        kernel,
        out_shape=jax.ShapeDtypeStruct((nc, B, _LANE), jnp.float32),
        grid_spec=pltpu.PrefetchScalarGridSpec(
            num_scalar_prefetch=0,
            grid=(nc, k_per_core),                    # reduction axis last
            in_specs=[pl.BlockSpec((B, rt, _LANE), in_index)],
            out_specs=pl.BlockSpec((1, B, _LANE), lambda c, k: (c, 0, 0)),
            scratch_shapes=[pltpu.VMEM((B, _LANE), jnp.float32)],
        ),
        compiler_params=pltpu.CompilerParams(
            dimension_semantics=("parallel", "arbitrary")),
        cost_estimate=pl.CostEstimate(
            flops=2 * B * R * _LANE, transcendentals=0,
            bytes_accessed=B * R * _LANE * itemsize + nc * B * _LANE * 4),
    )(g3)

    # Tiny O(B*128) epilogue: fold per-core lane partials, sqrt, batch mean.
    ssq = jnp.sum(partials, axis=(0, 2))              # (B,)
    norm = jnp.sqrt(ssq)
    return jnp.mean((norm - 1.0) ** 2)


# ----------------------------------------------------------------------------
# Module-equivalent wrapper: GradientPenaltyLoss.forward(interp, interp_crit)
# ----------------------------------------------------------------------------
def gradient_penalty_loss(critic_fn, interp):
    """Equivalent of GradientPenaltyLoss()(interp, critic_fn(interp)).

    torch.autograd.grad(outputs=interp_crit, inputs=interp, grad_outputs=ones)
    == vjp of critic_fn at interp with a cotangent of ones.
    """
    # TODO(synk): torch.autograd.grad has no Pallas equivalent; handled via jax.vjp glue.
    interp_crit, vjp_fn = jax.vjp(critic_fn, interp)
    grad_outputs = jnp.ones_like(interp_crit)         # get_grad_outputs(interp_crit)
    (grad_interp,) = vjp_fn(grad_outputs)
    return gradient_penalty_from_grads(grad_interp)


# ----------------------------------------------------------------------------
# Deterministic synthetic critic (supplies the interp -> interp_crit graph).
# ----------------------------------------------------------------------------
def make_critic(key, in_features, hidden=32):
    k1, k2 = jax.random.split(key)
    w1 = jax.random.normal(k1, (in_features, hidden), jnp.float32) * 0.05
    w2 = jax.random.normal(k2, (hidden, 1), jnp.float32) * 0.05

    def critic(x):
        xf = x.reshape(x.shape[0], -1)                # (B, C*H*W)
        h = jnp.tanh(xf @ w1)
        return h @ w2                                 # (B, 1) critic score

    return critic


# ----------------------------------------------------------------------------
# References (pure JAX) for verification
# ----------------------------------------------------------------------------
def _reference_loss(critic_fn, interp):
    interp_crit, vjp_fn = jax.vjp(critic_fn, interp)
    (g,) = vjp_fn(jnp.ones_like(interp_crit))
    g = g.reshape(g.shape[0], -1)
    n = jnp.linalg.norm(g, ord=2, axis=1)
    return jnp.mean((n - 1.0) ** 2)


def _reference_gp_from_grads(g):
    g = g.reshape(g.shape[0], -1).astype(jnp.float32)
    n = jnp.sqrt(jnp.sum(g * g, axis=1))
    return jnp.mean((n - 1.0) ** 2)


if __name__ == "__main__":
    key = jax.random.PRNGKey(0)
    k_x, k_w, k_g1, k_g2 = jax.random.split(key, 4)

    # 1) Full module-equivalent forward at the module's natural small shape
    #    (single-block fast path).
    B, C, H, W = 2, 4, 16, 16                         # NCHW, like the PyTorch input
    interp = jax.random.normal(k_x, (B, C, H, W), jnp.float32)
    critic = make_critic(k_w, C * H * W, hidden=32)

    loss_fn = jax.jit(functools.partial(gradient_penalty_loss, critic))
    loss = loss_fn(interp)
    jax.block_until_ready(loss)
    ref = _reference_loss(critic, interp)
    assert jnp.allclose(loss, ref, rtol=1e-5, atol=1e-6), (loss, ref)

    # 2) Exercise the tiled / multi-core path with a ragged row count
    #    (in-kernel mask + clamped padding tiles + multi-step accumulation).
    g_big = jax.random.normal(k_g1, (2, 128 * 100), jnp.float32)
    out2 = jax.jit(functools.partial(
        gradient_penalty_from_grads, target_block_bytes=16 * 1024))(g_big)
    jax.block_until_ready(out2)
    ref2 = _reference_gp_from_grads(g_big)
    assert jnp.allclose(out2, ref2, rtol=1e-5, atol=1e-6), (out2, ref2)

    # 3) bf16 gradients through the tiled path (native-dtype streaming, no mask).
    g_bf16 = jax.random.normal(k_g2, (2, 128 * 128), jnp.float32).astype(jnp.bfloat16)
    out3 = jax.jit(functools.partial(
        gradient_penalty_from_grads, target_block_bytes=32 * 1024))(g_bf16)
    jax.block_until_ready(out3)
    ref3 = _reference_gp_from_grads(g_bf16)
    assert jnp.allclose(out3, ref3, rtol=2e-5, atol=1e-5), (out3, ref3)

    print("KERNEL_OK")
</pallas_src>

<mosaic_0001>
module attributes {stable_mosaic.version = 11 : i64} {
  func.func @_gp_small_kernel(%arg0: i32, %arg1: memref<2x8x128xf32, #tpu.memory_space<vmem>>, %arg2: memref<1x1xf32, #tpu.memory_space<vmem>>) attributes {dimension_semantics = [#tpu.dimension_semantics<arbitrary>], iteration_bounds = array<i64: 1>, scalar_prefetch = 0 : i64, scratch_operands = 0 : i64, tpu.core_type = #tpu.core_type<tc>, window_params = [{pipeline_mode = #tpu.pipeline_mode<synchronous>, transform_indices = @transform_0, window_bounds = array<i64: 2, 8, 128>}, {pipeline_mode = #tpu.pipeline_mode<synchronous>, transform_indices = @transform_1, window_bounds = array<i64: 1, 1>}]} {
    %c0 = arith.constant 0 : index
    %c0_0 = arith.constant 0 : index
    %c0_1 = arith.constant 0 : index
    %0 = vector.load %arg1[%c0, %c0_0, %c0_1] : memref<2x8x128xf32, #tpu.memory_space<vmem>>, vector<2x8x128xf32>
    %1 = arith.mulf %0, %0 : vector<2x8x128xf32>
    %cst = arith.constant dense<0.000000e+00> : vector<2x128xf32>
    %2 = vector.multi_reduction <add>, %1, %cst [1] : vector<2x8x128xf32> to vector<2x128xf32>
    %cst_2 = arith.constant dense<0.000000e+00> : vector<2xf32>
    %3 = vector.multi_reduction <add>, %2, %cst_2 [1] : vector<2x128xf32> to vector<2xf32>
    %4 = vector.shape_cast %3 : vector<2xf32> to vector<2x1xf32>
    %5 = math.sqrt %4 : vector<2x1xf32>
    %cst_3 = arith.constant 1.000000e+00 : f32
    %6 = vector.broadcast %cst_3 : f32 to vector<2x1xf32>
    %7 = arith.subf %5, %6 : vector<2x1xf32>
    %8 = arith.mulf %7, %7 : vector<2x1xf32>
    %9 = vector.shape_cast %8 : vector<2x1xf32> to vector<1x2x1xf32>
    %cst_4 = arith.constant dense<0.000000e+00> : vector<1xf32>
    %10 = vector.multi_reduction <add>, %9, %cst_4 [1, 2] : vector<1x2x1xf32> to vector<1xf32>
    %11 = vector.shape_cast %10 : vector<1xf32> to vector<1x1x1xf32>
    %12 = vector.extract %11[0, 0, 0] : f32 from vector<1x1x1xf32>
    %13 = vector.broadcast %12 : f32 to vector<1x1xf32>
    %cst_5 = arith.constant 2.000000e+00 : f32
    %14 = vector.broadcast %cst_5 : f32 to vector<1x1xf32>
    %15 = arith.divf %13, %14 : vector<1x1xf32>
    %c0_6 = arith.constant 0 : index
    %c0_7 = arith.constant 0 : index
    %16 = vector.load %arg2[%c0_6, %c0_7] : memref<1x1xf32, #tpu.memory_space<vmem>>, vector<1x1xf32>
    tpu.vector_store %arg2[%c0_6, %c0_7], %15 {strides = array<i32>} : memref<1x1xf32, #tpu.memory_space<vmem>>, vector<1x1xf32>,
    return
  }
  func.func @transform_0(%arg0: i32) -> (i32, i32, i32) {
    %c0_i32 = arith.constant 0 : i32
    %c0_i32_0 = arith.constant 0 : i32
    %c0_i32_1 = arith.constant 0 : i32
    %c0_i32_2 = arith.constant 0 : i32
    return %c0_i32, %c0_i32_0, %c0_i32_1 : i32, i32, i32
  }
  func.func @transform_1(%arg0: i32) -> (i32, i32) {
    %c0_i32 = arith.constant 0 : i32
    %c0_i32_0 = arith.constant 0 : i32
    %c0_i32_1 = arith.constant 0 : i32
    return %c0_i32, %c0_i32_0 : i32, i32
  }
}

</mosaic_0001>

<llo_original>
// kernel: gradient_penalty_loss.1
$region0: #{gradient_penalty_loss.1}
  #allocation0 [shape = 'u32[]', space=smem, size = 0x4, offset = 0x4, fixed_abs, tag = 'smem constant byte address 0x4 - core index']
  #allocation1 [shape = 'u32[144,128]{1,0:T(1,128)}', space=vmem, size = 0x12000, scoped, tag = 'internal scratch']
  %s0 = inlined_call_operand.vmem [shape: f32[2,8,128], index: 0, kind: input, shape index: {}]
  %s1 = inlined_call_operand.hbm [shape: f32[1,1], index: 1, kind: output, shape index: {}]
  %s2 = sld [smem:[#allocation0]]
  $region14: #{gradient_penalty_loss.1} parent=0
    _
  %s4 = ssub.s32 1, %s2
  %s5 = scalar_select 0, %s4, %s2
  $region1: #{gradient_penalty_loss.1} parent=0
    #allocation2 [shape = 'u8[512]{0}', space=vmem, size = 0x400, scoped, tag = 'output window, operand 0, single buffered']
    #allocation3 [shape = 's32[1]{0}', space=sflag, size = 0x4, scoped, tag = 'scoped memory for gradient_penalty_loss.1']
    %6 = vsyncpa [#allocation3], 0
    // Predicated region
    $region2: #{gradient_penalty_loss.1} parent=1 // pred_check
      _
    $region3: #{gradient_penalty_loss.1} parent=1 // pred_check_branch
      %8 = sbr.rel (0) target = $region5
    $region4: #{gradient_penalty_loss.1} parent=1 // pred_region
      _
    $region5: #{gradient_penalty_loss.1} parent=1 // pred_fallthru
      _
    %v9 = vld [vmem:[%s0] sm:$0xff]
    %v10 = vld [vmem:[%s0 + $0x8] sm:$0xff]
    %v11 = vmul.f32 %v9, %v9
    %v12 = vmul.f32 %v10, %v10
    %v13 = vrot.slane %v11, 4
    %v14 = vadd.f32 %v11, %v13
    %v15 = vrot.slane %v14, 2
    %v16 = vadd.f32 %v14, %v15
    %v17 = vrot.slane %v16, 1
    %v18 = vadd.f32 %v16, %v17
    %v19 = vrot.slane %v12, 4
    %v20 = vadd.f32 %v12, %v19
    %v21 = vrot.slane %v20, 2
    %v22 = vadd.f32 %v20, %v21
    %v23 = vrot.slane %v22, 1
    %v24 = vadd.f32 %v22, %v23
    %vm27 = vcmask 1041409
    %v28 = vsel %vm27, %v24, %v18
    %vm30 = vcmask 1041408
    %v31 = vsel %vm30, %v28, 0.0
    %32 = vadd.xlane.f32.xlu0 %v31
    %v33 = vpop.xlane.xlu0 %32
    %v34 = vrsqrt.pop %v33
    %v35 = vmul.f32 %v33, %v34
    %vm36 = vcmp.eq.f32.partialorder %v33, inf
    %v37 = vsel %vm36, %v33, %v35
    %vm38 = vcmp.eq.f32.partialorder %v33, 0.0
    %v39 = vand.u32 %v33, 2147483648
    %v40 = vsel %vm38, %v39, %v37
    %v41 = vsub.f32 %v40, 1.0
    %v42 = vmul.f32 %v41, %v41
    %vm43 = vcmask 1024
    %v44 = vsel %vm43, %v42, 0.0
    %45 = vadd.xlane.f32.xlu0 %v44
    %v46 = vpop.xlane.xlu0 %45
    %v47 = vrot.slane %v46, 4
    %v48 = vadd.f32 %v46, %v47
    %v49 = vrot.slane %v48, 2
    %v50 = vadd.f32 %v48, %v49
    %v51 = vrot.slane %v50, 1
    %v52 = vadd.f32 %v50, %v51
    %s53 = vtos %v52
    %v54 = vstv %s53
    %v55 = vrcp.pop 2.0
    %v56 = vmul.f32 %v54, %v55
    %vm57 = vcmask 0
    %58 = vst.msk [vmem:[#allocation2] sm:$0x1] %vm57, %v56
    // Predicated region
    $region6: #{gradient_penalty_loss.1} parent=1 // pred_check
      _
    $region7: #{gradient_penalty_loss.1} parent=1 // pred_check_branch
      %60 = sbr.rel (0) target = $region9
    $region8: #{gradient_penalty_loss.1} parent=1 // pred_region
      %s62 = ssub.s32 16, 16
      %63 = vsyncadd [#allocation3], %s62
      %s65 = sshll.u32 [#allocation2], 4
      %s66 = int_to_ptr.vmem [resolvable:$true] %s65
      %68 = dma.vmem_to_hbm [thread:$0]  %s66, 16, %s1, [#allocation3]
    $region9: #{gradient_penalty_loss.1} parent=1 // pred_fallthru
      _
    // Predicated region
    $region10: #{gradient_penalty_loss.1} parent=1 // pred_check
      _
    $region11: #{gradient_penalty_loss.1} parent=1 // pred_check_branch
      %70 = sbr.rel (0) target = $region13
    $region12: #{gradient_penalty_loss.1} parent=1 // pred_region
      %71 = dma.done [#allocation3], 16
    $region13: #{gradient_penalty_loss.1} parent=1 // pred_fallthru
      _
    %72 = vsyncpa [#allocation3], 1

</llo_original>
